<compile_context>
chip_gen: v7x
topology: tpu7x:2x2x1
jax: 0.10.0
libtpu: 0.0.40
codegen_flags: <defaults>
</compile_context>

<pallas_src>
import jax
import jax.numpy as jnp
from jax.experimental import pallas as pl
from jax.experimental.pallas import tpu as pltpu

_LANE = 128
_SUBLANE = 8


def _round_up(n, m):
    return ((n + m - 1) // m) * m


def _actor_kernel(x_ref, w1_ref, b1_ref, w2_ref, b2_ref, w3_ref, b3_ref, mu_ref):
    # Fused 3-layer MLP.  Matmul operands are bf16 (MXU-native on v5e/v6e/v7x),
    # accumulation is f32, and the elementwise epilogue (bias/ReLU/tanh) is f32.
    x = x_ref[...]                                          # (TB, K_pad) bf16
    h1 = jnp.dot(x, w1_ref[...], preferred_element_type=jnp.float32) + b1_ref[...]
    h1 = jnp.maximum(h1, 0.0)
    h2 = jnp.dot(h1.astype(jnp.bfloat16), w2_ref[...],
                 preferred_element_type=jnp.float32) + b2_ref[...]
    h2 = jnp.maximum(h2, 0.0)
    mu = jnp.dot(h2.astype(jnp.bfloat16), w3_ref[...],
                 preferred_element_type=jnp.float32) + b3_ref[...]
    mu_ref[...] = jnp.tanh(mu).astype(mu_ref.dtype)         # (TB, 128) lane-dense store


@jax.jit
def actor_forward(x, params):
    """Returns (mu, log_std), matching Actor.forward.

    params holds kernel-ready (padded, bf16-weight) tensors from pack_actor_params.
    """
    w1, b1, w2, b2, w3, b3, log_std = (
        params["w1"], params["b1"], params["w2"], params["b2"],
        params["w3"], params["b3"], params["log_std"],
    )
    B, state_dim = x.shape
    action_dim = log_std.shape[0]
    k_pad, hidden = w1.shape          # (128*ceil(state_dim/128), 256)
    head_pad = w3.shape[1]            # 128*ceil(action_dim/128)

    # Batch tile: multiple of 8 sublanes; cap at 256 rows per grid step so
    # large rollout batches pipeline x-in / mu-out DMA against compute.
    tile_b = 256 if B >= 256 else _round_up(B, _SUBLANE)
    b_pad = _round_up(B, tile_b)

    # Zero-pad batch + feature dims and cast activations to bf16 for the MXU.
    xp = jnp.zeros((b_pad, k_pad), dtype=jnp.bfloat16)
    xp = xp.at[:B, :state_dim].set(x.astype(jnp.bfloat16))

    grid = (pl.cdiv(b_pad, tile_b),)

    flops = 2 * b_pad * (k_pad * hidden + hidden * hidden + hidden * head_pad)
    bytes_accessed = (
        b_pad * k_pad * 2                       # x (bf16)
        + (k_pad * hidden + hidden * hidden + hidden * head_pad) * 2   # weights (bf16)
        + (hidden + hidden + head_pad) * 4      # biases (f32)
        + b_pad * head_pad * 4                  # mu (f32)
    )
    cost = pl.CostEstimate(flops=flops,
                           transcendentals=b_pad * head_pad,
                           bytes_accessed=bytes_accessed)

    mu_pad = pl.pallas_call(
        _actor_kernel,
        out_shape=jax.ShapeDtypeStruct((b_pad, head_pad), jnp.float32),
        grid=grid,
        in_specs=[
            pl.BlockSpec((tile_b, k_pad), lambda i: (i, 0)),     # x streams per tile
            pl.BlockSpec((k_pad, hidden), lambda i: (0, 0)),     # weights stay resident
            pl.BlockSpec((1, hidden), lambda i: (0, 0)),
            pl.BlockSpec((hidden, hidden), lambda i: (0, 0)),
            pl.BlockSpec((1, hidden), lambda i: (0, 0)),
            pl.BlockSpec((hidden, head_pad), lambda i: (0, 0)),
            pl.BlockSpec((1, head_pad), lambda i: (0, 0)),
        ],
        out_specs=pl.BlockSpec((tile_b, head_pad), lambda i: (i, 0)),
        compiler_params=pltpu.CompilerParams(
            dimension_semantics=("parallel",)),                  # 2x on v7x dual-TC
        cost_estimate=cost,
    )(xp, w1, b1, w2, b2, w3, b3)

    mu = mu_pad[:B, :action_dim]
    return mu, log_std


def init_actor_params_f32(key, state_dim, action_dim, size=256):
    """Unpadded f32 params mirroring the PyTorch __init__:
       weights ~ U(-0.001, 0.001), biases ~ U(-1/sqrt(fan_in), 1/sqrt(fan_in)),
       log_std = zeros(action_dim).  Weights are stored transposed vs. PyTorch,
       i.e. W has shape (in, out) so forward computes x @ W + b."""
    k = jax.random.split(key, 6)
    u = lambda kk, shape, lo, hi: jax.random.uniform(
        kk, shape, dtype=jnp.float32, minval=lo, maxval=hi)
    bb = lambda fan_in: 1.0 / float(jnp.sqrt(jnp.float32(fan_in)))
    return {
        "w1": u(k[0], (state_dim, size), -0.001, 0.001),
        "b1": u(k[1], (1, size), -bb(state_dim), bb(state_dim)),
        "w2": u(k[2], (size, size), -0.001, 0.001),
        "b2": u(k[3], (1, size), -bb(size), bb(size)),
        "w3": u(k[4], (size, action_dim), -0.001, 0.001),
        "b3": u(k[5], (1, action_dim), -bb(size), bb(size)),
        "log_std": jnp.zeros((action_dim,), dtype=jnp.float32),
    }


def pack_actor_params(raw):
    """Pad to lane-dense shapes and cast weights to bf16 for the kernel.
       Biases and log_std stay f32 (f32 epilogue)."""
    state_dim, size = raw["w1"].shape
    action_dim = raw["w3"].shape[1]
    k_pad = _round_up(state_dim, _LANE)
    head_pad = _round_up(action_dim, _LANE)

    w1 = jnp.zeros((k_pad, size), jnp.float32).at[:state_dim, :].set(raw["w1"])
    w3 = jnp.zeros((size, head_pad), jnp.float32).at[:, :action_dim].set(raw["w3"])
    b3 = jnp.zeros((1, head_pad), jnp.float32).at[:, :action_dim].set(raw["b3"])
    return {
        "w1": w1.astype(jnp.bfloat16),
        "b1": raw["b1"],
        "w2": raw["w2"].astype(jnp.bfloat16),
        "b2": raw["b2"],
        "w3": w3.astype(jnp.bfloat16),
        "b3": b3,
        "log_std": raw["log_std"],
    }


if __name__ == "__main__":
    key = jax.random.PRNGKey(0)
    k_params, k_x = jax.random.split(key)

    batch, state_dim, action_dim, size = 8, 16, 8, 256
    raw = init_actor_params_f32(k_params, state_dim, action_dim, size=size)
    params = pack_actor_params(raw)
    x = jax.random.normal(k_x, (batch, state_dim), dtype=jnp.float32)

    mu, log_std = actor_forward(x, params)
    jax.block_until_ready((mu, log_std))

    # Reference in plain JAX using the same bf16-operand / f32-accumulate math.
    bf = lambda a: a.astype(jnp.bfloat16)
    h1 = jax.nn.relu(jnp.dot(bf(x), bf(raw["w1"]),
                             preferred_element_type=jnp.float32) + raw["b1"])
    h2 = jax.nn.relu(jnp.dot(bf(h1), bf(raw["w2"]),
                             preferred_element_type=jnp.float32) + raw["b2"])
    mu_ref = jnp.tanh(jnp.dot(bf(h2), bf(raw["w3"]),
                              preferred_element_type=jnp.float32) + raw["b3"])

    assert mu.shape == (batch, action_dim)
    assert log_std.shape == (action_dim,)
    assert jnp.allclose(mu, mu_ref, atol=1e-4, rtol=1e-3), (
        float(jnp.max(jnp.abs(mu - mu_ref))))

    # Loose sanity check against the pure-f32 reference (bf16 quantization only).
    h1f = jax.nn.relu(x @ raw["w1"] + raw["b1"])
    h2f = jax.nn.relu(h1f @ raw["w2"] + raw["b2"])
    mu_f32 = jnp.tanh(h2f @ raw["w3"] + raw["b3"])
    assert jnp.allclose(mu, mu_f32, atol=2e-2, rtol=2e-2)

    print("KERNEL_OK")
</pallas_src>

<mosaic_0001>
module attributes {stable_mosaic.version = 11 : i64} {
  func.func @_actor_kernel(%arg0: i32, %arg1: memref<8x128xbf16, #tpu.memory_space<vmem>>, %arg2: memref<128x256xbf16, #tpu.memory_space<vmem>>, %arg3: memref<1x256xf32, #tpu.memory_space<vmem>>, %arg4: memref<256x256xbf16, #tpu.memory_space<vmem>>, %arg5: memref<1x256xf32, #tpu.memory_space<vmem>>, %arg6: memref<256x128xbf16, #tpu.memory_space<vmem>>, %arg7: memref<1x128xf32, #tpu.memory_space<vmem>>, %arg8: memref<8x128xf32, #tpu.memory_space<vmem>>) attributes {dimension_semantics = [#tpu.dimension_semantics<parallel>], iteration_bounds = array<i64: 1>, scalar_prefetch = 0 : i64, scratch_operands = 0 : i64, tpu.core_type = #tpu.core_type<tc>, window_params = [{transform_indices = @transform_0, window_bounds = array<i64: 8, 128>}, {pipeline_mode = #tpu.pipeline_mode<synchronous>, transform_indices = @transform_1, window_bounds = array<i64: 128, 256>}, {pipeline_mode = #tpu.pipeline_mode<synchronous>, transform_indices = @transform_2, window_bounds = array<i64: 1, 256>}, {pipeline_mode = #tpu.pipeline_mode<synchronous>, transform_indices = @transform_3, window_bounds = array<i64: 256, 256>}, {pipeline_mode = #tpu.pipeline_mode<synchronous>, transform_indices = @transform_4, window_bounds = array<i64: 1, 256>}, {pipeline_mode = #tpu.pipeline_mode<synchronous>, transform_indices = @transform_5, window_bounds = array<i64: 256, 128>}, {pipeline_mode = #tpu.pipeline_mode<synchronous>, transform_indices = @transform_6, window_bounds = array<i64: 1, 128>}, {transform_indices = @transform_7, window_bounds = array<i64: 8, 128>}]} {
    %c0 = arith.constant 0 : index
    %c0_0 = arith.constant 0 : index
    %0 = vector.load %arg1[%c0, %c0_0] : memref<8x128xbf16, #tpu.memory_space<vmem>>, vector<8x128xbf16>
    %c0_1 = arith.constant 0 : index
    %c0_2 = arith.constant 0 : index
    %1 = vector.load %arg2[%c0_1, %c0_2] : memref<128x256xbf16, #tpu.memory_space<vmem>>, vector<128x256xbf16>
    %cst = arith.constant dense<0.000000e+00> : vector<8x256xf32>
    %2 = tpu.matmul %0, %1, %cst {dimension_numbers = #tpu.dot_dimension_numbers<[1], [0], [0], [1], [0, 0, 1, 1], [], []>} : vector<8x128xbf16>, vector<128x256xbf16>, vector<8x256xf32> -> vector<8x256xf32>
    %c0_3 = arith.constant 0 : index
    %c0_4 = arith.constant 0 : index
    %3 = vector.load %arg3[%c0_3, %c0_4] : memref<1x256xf32, #tpu.memory_space<vmem>>, vector<1x256xf32>
    %4 = vector.broadcast %3 : vector<1x256xf32> to vector<8x256xf32>
    %5 = arith.addf %2, %4 : vector<8x256xf32>
    %cst_5 = arith.constant 0.000000e+00 : f32
    %6 = vector.broadcast %cst_5 : f32 to vector<8x256xf32>
    %7 = arith.maximumf %5, %6 : vector<8x256xf32>
    %8 = arith.truncf %7 : vector<8x256xf32> to vector<8x256xbf16>
    %c0_6 = arith.constant 0 : index
    %c0_7 = arith.constant 0 : index
    %9 = vector.load %arg4[%c0_6, %c0_7] : memref<256x256xbf16, #tpu.memory_space<vmem>>, vector<256x256xbf16>
    %cst_8 = arith.constant dense<0.000000e+00> : vector<8x256xf32>
    %10 = tpu.matmul %8, %9, %cst_8 {dimension_numbers = #tpu.dot_dimension_numbers<[1], [0], [0], [1], [0, 0, 1, 1], [], []>} : vector<8x256xbf16>, vector<256x256xbf16>, vector<8x256xf32> -> vector<8x256xf32>
    %c0_9 = arith.constant 0 : index
    %c0_10 = arith.constant 0 : index
    %11 = vector.load %arg5[%c0_9, %c0_10] : memref<1x256xf32, #tpu.memory_space<vmem>>, vector<1x256xf32>
    %12 = vector.broadcast %11 : vector<1x256xf32> to vector<8x256xf32>
    %13 = arith.addf %10, %12 : vector<8x256xf32>
    %cst_11 = arith.constant 0.000000e+00 : f32
    %14 = vector.broadcast %cst_11 : f32 to vector<8x256xf32>
    %15 = arith.maximumf %13, %14 : vector<8x256xf32>
    %16 = arith.truncf %15 : vector<8x256xf32> to vector<8x256xbf16>
    %c0_12 = arith.constant 0 : index
    %c0_13 = arith.constant 0 : index
    %17 = vector.load %arg6[%c0_12, %c0_13] : memref<256x128xbf16, #tpu.memory_space<vmem>>, vector<256x128xbf16>
    %cst_14 = arith.constant dense<0.000000e+00> : vector<8x128xf32>
    %18 = tpu.matmul %16, %17, %cst_14 {dimension_numbers = #tpu.dot_dimension_numbers<[1], [0], [0], [1], [0, 0, 1, 1], [], []>} : vector<8x256xbf16>, vector<256x128xbf16>, vector<8x128xf32> -> vector<8x128xf32>
    %c0_15 = arith.constant 0 : index
    %c0_16 = arith.constant 0 : index
    %19 = vector.load %arg7[%c0_15, %c0_16] : memref<1x128xf32, #tpu.memory_space<vmem>>, vector<1x128xf32>
    %20 = vector.broadcast %19 : vector<1x128xf32> to vector<8x128xf32>
    %21 = arith.addf %18, %20 : vector<8x128xf32>
    %22 = math.tanh %21 : vector<8x128xf32>
    %c0_17 = arith.constant 0 : index
    %c0_18 = arith.constant 0 : index
    %23 = vector.load %arg8[%c0_17, %c0_18] : memref<8x128xf32, #tpu.memory_space<vmem>>, vector<8x128xf32>
    tpu.vector_store %arg8[%c0_17, %c0_18], %22 {strides = array<i32>} : memref<8x128xf32, #tpu.memory_space<vmem>>, vector<8x128xf32>,
    return
  }
  func.func @transform_0(%arg0: i32) -> (i32, i32) {
    %c0_i32 = arith.constant 0 : i32
    %c0_i32_0 = arith.constant 0 : i32
    return %arg0, %c0_i32 : i32, i32
  }
  func.func @transform_1(%arg0: i32) -> (i32, i32) {
    %c0_i32 = arith.constant 0 : i32
    %c0_i32_0 = arith.constant 0 : i32
    %c0_i32_1 = arith.constant 0 : i32
    return %c0_i32, %c0_i32_0 : i32, i32
  }
  func.func @transform_2(%arg0: i32) -> (i32, i32) {
    %c0_i32 = arith.constant 0 : i32
    %c0_i32_0 = arith.constant 0 : i32
    %c0_i32_1 = arith.constant 0 : i32
    return %c0_i32, %c0_i32_0 : i32, i32
  }
  func.func @transform_3(%arg0: i32) -> (i32, i32) {
    %c0_i32 = arith.constant 0 : i32
    %c0_i32_0 = arith.constant 0 : i32
    %c0_i32_1 = arith.constant 0 : i32
    return %c0_i32, %c0_i32_0 : i32, i32
  }
  func.func @transform_4(%arg0: i32) -> (i32, i32) {
    %c0_i32 = arith.constant 0 : i32
    %c0_i32_0 = arith.constant 0 : i32
    %c0_i32_1 = arith.constant 0 : i32
    return %c0_i32, %c0_i32_0 : i32, i32
  }
  func.func @transform_5(%arg0: i32) -> (i32, i32) {
    %c0_i32 = arith.constant 0 : i32
    %c0_i32_0 = arith.constant 0 : i32
    %c0_i32_1 = arith.constant 0 : i32
    return %c0_i32, %c0_i32_0 : i32, i32
  }
  func.func @transform_6(%arg0: i32) -> (i32, i32) {
    %c0_i32 = arith.constant 0 : i32
    %c0_i32_0 = arith.constant 0 : i32
    %c0_i32_1 = arith.constant 0 : i32
    return %c0_i32, %c0_i32_0 : i32, i32
  }
  func.func @transform_7(%arg0: i32) -> (i32, i32) {
    %c0_i32 = arith.constant 0 : i32
    %c0_i32_0 = arith.constant 0 : i32
    return %arg0, %c0_i32 : i32, i32
  }
}

</mosaic_0001>

<llo_original>
// kernel: actor_forward.1
$region0: #{actor_forward.1}
  #allocation0 [shape = 'u32[]', space=smem, size = 0x4, offset = 0x4, fixed_abs, tag = 'smem constant byte address 0x4 - core index']
  #allocation1 [shape = 'u32[144,128]{1,0:T(1,128)}', space=vmem, size = 0x12000, scoped, tag = 'internal scratch']
  %s0 = inlined_call_operand.vmem [shape: bf16[8,128], index: 0, kind: input, shape index: {}]
  %s1 = inlined_call_operand.hbm [shape: bf16[128,256], index: 1, kind: input, shape index: {}]
  %s2 = inlined_call_operand.vmem [shape: f32[1,256], index: 2, kind: input, shape index: {}]
  %s3 = inlined_call_operand.hbm [shape: bf16[256,256], index: 3, kind: input, shape index: {}]
  %s4 = inlined_call_operand.vmem [shape: f32[1,256], index: 4, kind: input, shape index: {}]
  %s5 = inlined_call_operand.hbm [shape: bf16[256,128], index: 5, kind: input, shape index: {}]
  %s6 = inlined_call_operand.vmem [shape: f32[1,128], index: 6, kind: input, shape index: {}]
  %s7 = inlined_call_operand.hbm [shape: f32[8,128], index: 7, kind: output, shape index: {}]
  %s8 = sld [smem:[#allocation0]]
  $region50: #{actor_forward.1} parent=0
    _
  %s10 = ssub.s32 1, %s8
  %s11 = scalar_select 0, %s10, %s8
  $region1: #{actor_forward.1} parent=0
    #allocation2 [shape = 'u8[65536]{0}', space=vmem, size = 0x10000, scoped, tag = 'input window, operand 1, single buffered']
    #allocation3 [shape = 's32[1]{0}', space=sflag, size = 0x4, scoped, tag = 'scoped memory for actor_forward.1']
    #allocation4 [shape = 's32[1]{0}', space=sflag, size = 0x4, scoped, tag = 'scoped memory for actor_forward.1']
    #allocation5 [shape = 'u8[131072]{0}', space=vmem, size = 0x20000, scoped, tag = 'input window, operand 3, single buffered']
    #allocation6 [shape = 's32[1]{0}', space=sflag, size = 0x4, scoped, tag = 'scoped memory for actor_forward.1']
    #allocation7 [shape = 'u8[65536]{0}', space=vmem, size = 0x10000, scoped, tag = 'input window, operand 5, single buffered']
    #allocation8 [shape = 'u8[4096]{0}', space=vmem, size = 0x1000, scoped, tag = 'output window, operand 0, single buffered']
    %12 = vsyncpa [#allocation3], 0
    %13 = vsyncpa [#allocation6], 0
    %14 = vsyncpa [#allocation4], 0
    // Predicated region
    $region2: #{actor_forward.1} parent=1 // pred_check
      _
    $region3: #{actor_forward.1} parent=1 // pred_check_branch
      %16 = sbr.rel (0) target = $region5
    $region4: #{actor_forward.1} parent=1 // pred_region
      _
    $region5: #{actor_forward.1} parent=1 // pred_fallthru
      _
    // Predicated region
    $region6: #{actor_forward.1} parent=1 // pred_check
      _
    $region7: #{actor_forward.1} parent=1 // pred_check_branch
      %18 = sbr.rel (0) target = $region9
    $region8: #{actor_forward.1} parent=1 // pred_region
      %s20 = ssub.s32 2048, 2048
      %21 = vsyncadd [#allocation3], %s20
      %s22 = sshll.u32 [#allocation2], 4
      %s23 = int_to_ptr.vmem [resolvable:$true] %s22
      %28 = dma.hbm_to_vmem [thread:$0]  %s1, 2048, %s23, [#allocation3], 128, 128, 8
    $region9: #{actor_forward.1} parent=1 // pred_fallthru
      _
    // Predicated region
    $region10: #{actor_forward.1} parent=1 // pred_check
      _
    $region11: #{actor_forward.1} parent=1 // pred_check_branch
      %30 = sbr.rel (0) target = $region13
    $region12: #{actor_forward.1} parent=1 // pred_region
      _
    $region13: #{actor_forward.1} parent=1 // pred_fallthru
      _
    // Predicated region
    $region14: #{actor_forward.1} parent=1 // pred_check
      _
    $region15: #{actor_forward.1} parent=1 // pred_check_branch
      %32 = sbr.rel (0) target = $region17
    $region16: #{actor_forward.1} parent=1 // pred_region
      %s34 = ssub.s32 4096, 4096
      %35 = vsyncadd [#allocation6], %s34
      %s36 = sshll.u32 [#allocation5], 4
      %s37 = int_to_ptr.vmem [resolvable:$true] %s36
      %42 = dma.hbm_to_vmem [thread:$0]  %s3, 4096, %s37, [#allocation6], 128, 128, 8
    $region17: #{actor_forward.1} parent=1 // pred_fallthru
      _
    // Predicated region
    $region18: #{actor_forward.1} parent=1 // pred_check
      _
    $region19: #{actor_forward.1} parent=1 // pred_check_branch
      %44 = sbr.rel (0) target = $region21
    $region20: #{actor_forward.1} parent=1 // pred_region
      _
    $region21: #{actor_forward.1} parent=1 // pred_fallthru
      _
    // Predicated region
    $region22: #{actor_forward.1} parent=1 // pred_check
      _
    $region23: #{actor_forward.1} parent=1 // pred_check_branch
      %46 = sbr.rel (0) target = $region25
    $region24: #{actor_forward.1} parent=1 // pred_region
      %s48 = ssub.s32 2048, 2048
      %49 = vsyncadd [#allocation6], %s48
      %s50 = sshll.u32 [#allocation7], 4
      %s51 = int_to_ptr.vmem [resolvable:$true] %s50
      %56 = dma.hbm_to_vmem [thread:$0]  %s5, 2048, %s51, [#allocation6], 64, 64, 4
    $region25: #{actor_forward.1} parent=1 // pred_fallthru
      _
    // Predicated region
    $region26: #{actor_forward.1} parent=1 // pred_check
      _
    $region27: #{actor_forward.1} parent=1 // pred_check_branch
      %58 = sbr.rel (0) target = $region29
    $region28: #{actor_forward.1} parent=1 // pred_region
      _
    $region29: #{actor_forward.1} parent=1 // pred_fallthru
      _
    // Predicated region
    $region30: #{actor_forward.1} parent=1 // pred_check
      _
    $region31: #{actor_forward.1} parent=1 // pred_check_branch
      %60 = sbr.rel (0) target = $region33
    $region32: #{actor_forward.1} parent=1 // pred_region
      %61 = dma.done [#allocation3], 2048
    $region33: #{actor_forward.1} parent=1 // pred_fallthru
      _
    // Predicated region
    $region34: #{actor_forward.1} parent=1 // pred_check
      _
    $region35: #{actor_forward.1} parent=1 // pred_check_branch
      %63 = sbr.rel (0) target = $region37
    $region36: #{actor_forward.1} parent=1 // pred_region
      %64 = dma.done [#allocation6], 4096
    $region37: #{actor_forward.1} parent=1 // pred_fallthru
      _
    // Predicated region
    $region38: #{actor_forward.1} parent=1 // pred_check
      _
    $region39: #{actor_forward.1} parent=1 // pred_check_branch
      %66 = sbr.rel (0) target = $region41
    $region40: #{actor_forward.1} parent=1 // pred_region
      %67 = dma.done [#allocation6], 2048
    $region41: #{actor_forward.1} parent=1 // pred_fallthru
      _
    %v69 = vld [vmem:[%s0] sm:$0xf]
    %v70 = vld [vmem:[#allocation2] sm:$0xff]
    %v71 = vld [vmem:[#allocation2 + $0x8] sm:$0xff]
    %v72 = vld [vmem:[#allocation2 + $0x10] sm:$0xff]
    %v73 = vld [vmem:[#allocation2 + $0x18] sm:$0xff]
    %v74 = vld [vmem:[#allocation2 + $0x20] sm:$0xff]
    %v75 = vld [vmem:[#allocation2 + $0x28] sm:$0xff]
    %v76 = vld [vmem:[#allocation2 + $0x30] sm:$0xff]
    %v77 = vld [vmem:[#allocation2 + $0x38] sm:$0xff]
    %v78 = vld [vmem:[#allocation2 + $0x40] sm:$0xff]
    %v79 = vld [vmem:[#allocation2 + $0x48] sm:$0xff]
    %v80 = vld [vmem:[#allocation2 + $0x50] sm:$0xff]
    %v81 = vld [vmem:[#allocation2 + $0x58] sm:$0xff]
    %v82 = vld [vmem:[#allocation2 + $0x60] sm:$0xff]
    %v83 = vld [vmem:[#allocation2 + $0x68] sm:$0xff]
    %v84 = vld [vmem:[#allocation2 + $0x70] sm:$0xff]
    %v85 = vld [vmem:[#allocation2 + $0x78] sm:$0xff]
    %v86 = vld [vmem:[%s2] sm:$0x3]
    %v88 = vlaneseq
    %v89 = vshrl.u32 %v88, 7
    %v90 = vsub.s32 0, %v89
    %v91 = vrot.slane %v86, %v90
    %v92 = vlaneseq
    %v93 = vshrl.u32 %v92, 7
    %v94 = vsub.s32 1, %v93
    %v95 = vrot.slane %v86, %v94
    %v114 = vunpack.c.l.b16 %v70
    %v115 = vunpack.c.h.b16 %v70
    %v116 = vunpack.c.l.b16 %v71
    %v117 = vunpack.c.h.b16 %v71
    %v118 = vunpack.c.l.b16 %v72
    %v119 = vunpack.c.h.b16 %v72
    %v120 = vunpack.c.l.b16 %v73
    %v121 = vunpack.c.h.b16 %v73
    %v122 = vunpack.c.l.b16 %v74
    %v123 = vunpack.c.h.b16 %v74
    %v124 = vunpack.c.l.b16 %v75
    %v125 = vunpack.c.h.b16 %v75
    %v126 = vunpack.c.l.b16 %v76
    %v127 = vunpack.c.h.b16 %v76
    %v128 = vunpack.c.l.b16 %v77
    %v129 = vunpack.c.h.b16 %v77
    %v130 = vunpack.c.l.b16 %v78
    %v131 = vunpack.c.h.b16 %v78
    %v132 = vunpack.c.l.b16 %v79
    %v133 = vunpack.c.h.b16 %v79
    %v134 = vunpack.c.l.b16 %v80
    %v135 = vunpack.c.h.b16 %v80
    %v136 = vunpack.c.l.b16 %v81
    %v137 = vunpack.c.h.b16 %v81
    %v138 = vunpack.c.l.b16 %v82
    %v139 = vunpack.c.h.b16 %v82
    %v140 = vunpack.c.l.b16 %v83
    %v141 = vunpack.c.h.b16 %v83
    %v142 = vunpack.c.l.b16 %v84
    %v143 = vunpack.c.h.b16 %v84
    %v144 = vunpack.c.l.b16 %v85
    %v145 = vunpack.c.h.b16 %v85
    %v146 = vpack.c.b16 %v116, %v114
    %v147 = vpack.c.b16 %v117, %v115
    %v148 = vpack.c.b16 %v120, %v118
    %v149 = vpack.c.b16 %v121, %v119
    %v150 = vpack.c.b16 %v124, %v122
    %v151 = vpack.c.b16 %v125, %v123
    %v152 = vpack.c.b16 %v128, %v126
    %v153 = vpack.c.b16 %v129, %v127
    %v154 = vpack.c.b16 %v132, %v130
    %v155 = vpack.c.b16 %v133, %v131
    %v156 = vpack.c.b16 %v136, %v134
    %v157 = vpack.c.b16 %v137, %v135
    %v158 = vpack.c.b16 %v140, %v138
    %v159 = vpack.c.b16 %v141, %v139
    %v160 = vpack.c.b16 %v144, %v142
    %v161 = vpack.c.b16 %v145, %v143
    %178 = vmatprep.subr.bf16.mxu0 %v147
    %179 = vmatpush1.bf16.msra.mxu0 %v146
    %180 = vmatprep.subr.bf16.mxu0 %v149
    %181 = vmatpush1.bf16.msra.mxu0 %v148
    %182 = vmatprep.subr.bf16.mxu0 %v151
    %183 = vmatpush1.bf16.msra.mxu0 %v150
    %184 = vmatprep.subr.bf16.mxu0 %v153
    %185 = vmatpush1.bf16.msra.mxu0 %v152
    %186 = vmatprep.subr.bf16.mxu0 %v155
    %187 = vmatpush1.bf16.msra.mxu0 %v154
    %188 = vmatprep.subr.bf16.mxu0 %v157
    %189 = vmatpush1.bf16.msra.mxu0 %v156
    %190 = vmatprep.subr.bf16.mxu0 %v159
    %191 = vmatpush1.bf16.msra.mxu0 %v158
    %192 = vmatprep.subr.bf16.mxu0 %v161
    %193 = vmatpush1.bf16.msra.mxu0 %v160
    %194 = vmatprep.subr.bf16.mxu0 0
    %195 = vmatpush1.bf16.msra.mxu0 0
    %196 = vmatprep.subr.bf16.mxu0 0
    %197 = vmatpush1.bf16.msra.mxu0 0
    %198 = vmatprep.subr.bf16.mxu0 0
    %199 = vmatpush1.bf16.msra.mxu0 0
    %200 = vmatprep.subr.bf16.mxu0 0
    %201 = vmatpush1.bf16.msra.mxu0 0
    %202 = vmatprep.subr.bf16.mxu0 0
    %203 = vmatpush1.bf16.msra.mxu0 0
    %204 = vmatprep.subr.bf16.mxu0 0
    %205 = vmatpush1.bf16.msra.mxu0 0
    %206 = vmatprep.subr.bf16.mxu0 0
    %207 = vmatpush1.bf16.msra.mxu0 0
    %208 = vmatprep.subr.bf16.mxu0 0
    %209 = vmatpush1.bf16.msra.mxu0 0
    %210 = vmatprep.mubr.bf16.mxu0 0
    %211 = vmatmul.mubr.bf16.gmra.mrb[0].mxu0 %v69
    %v212 = vpop.f32.mrb[0].mxu0
    %v213 = vadd.f32 %v91, %v212
    %v214 = vpop.f32.mrb[0].mxu0
    %v215 = vadd.f32 %v95, %v214
    %v216 = vpop.f32.mrb[0].mxu0
    %v217 = vpop.f32.mrb[0].mxu0
    %218 = vdwg.mxu0
    %v219 = vmax.f32 %v213, 0.0
    %v220 = vmax.f32 %v215, 0.0
    %v221 = vpack.c.bf16 %v219, %v219
    %v222 = vpack.c.bf16 %v220, %v220
    %v223 = vld [vmem:[#allocation5] sm:$0xff]
    %v224 = vld [vmem:[#allocation5 + $0x8] sm:$0xff]
    %v225 = vld [vmem:[#allocation5 + $0x10] sm:$0xff]
    %v226 = vld [vmem:[#allocation5 + $0x18] sm:$0xff]
    %v227 = vld [vmem:[#allocation5 + $0x20] sm:$0xff]
    %v228 = vld [vmem:[#allocation5 + $0x28] sm:$0xff]
    %v229 = vld [vmem:[#allocation5 + $0x30] sm:$0xff]
    %v230 = vld [vmem:[#allocation5 + $0x38] sm:$0xff]
    %v231 = vld [vmem:[#allocation5 + $0x40] sm:$0xff]
    %v232 = vld [vmem:[#allocation5 + $0x48] sm:$0xff]
    %v233 = vld [vmem:[#allocation5 + $0x50] sm:$0xff]
    %v234 = vld [vmem:[#allocation5 + $0x58] sm:$0xff]
    %v235 = vld [vmem:[#allocation5 + $0x60] sm:$0xff]
    %v236 = vld [vmem:[#allocation5 + $0x68] sm:$0xff]
    %v237 = vld [vmem:[#allocation5 + $0x70] sm:$0xff]
    %v238 = vld [vmem:[#allocation5 + $0x78] sm:$0xff]
    %v239 = vld [vmem:[#allocation5 + $0x80] sm:$0xff]
    %v240 = vld [vmem:[#allocation5 + $0x88] sm:$0xff]
    %v241 = vld [vmem:[#allocation5 + $0x90] sm:$0xff]
    %v242 = vld [vmem:[#allocation5 + $0x98] sm:$0xff]
    %v243 = vld [vmem:[#allocation5 + $0xa0] sm:$0xff]
    %v244 = vld [vmem:[#allocation5 + $0xa8] sm:$0xff]
    %v245 = vld [vmem:[#allocation5 + $0xb0] sm:$0xff]
    %v246 = vld [vmem:[#allocation5 + $0xb8] sm:$0xff]
    %v247 = vld [vmem:[#allocation5 + $0xc0] sm:$0xff]
    %v248 = vld [vmem:[#allocation5 + $0xc8] sm:$0xff]
    %v249 = vld [vmem:[#allocation5 + $0xd0] sm:$0xff]
    %v250 = vld [vmem:[#allocation5 + $0xd8] sm:$0xff]
    %v251 = vld [vmem:[#allocation5 + $0xe0] sm:$0xff]
    %v252 = vld [vmem:[#allocation5 + $0xe8] sm:$0xff]
    %v253 = vld [vmem:[#allocation5 + $0xf0] sm:$0xff]
    %v254 = vld [vmem:[#allocation5 + $0xf8] sm:$0xff]
    %v255 = vld [vmem:[%s4] sm:$0x3]
    %v257 = vlaneseq
    %v258 = vshrl.u32 %v257, 7
    %v259 = vsub.s32 0, %v258
    %v260 = vrot.slane %v255, %v259
    %v261 = vlaneseq
    %v262 = vshrl.u32 %v261, 7
    %v263 = vsub.s32 1, %v262
    %v264 = vrot.slane %v255, %v263
    %v299 = vunpack.c.l.b16 %v223
    %v300 = vunpack.c.h.b16 %v223
    %v301 = vunpack.c.l.b16 %v224
    %v302 = vunpack.c.h.b16 %v224
    %v303 = vunpack.c.l.b16 %v225
    %v304 = vunpack.c.h.b16 %v225
    %v305 = vunpack.c.l.b16 %v226
    %v306 = vunpack.c.h.b16 %v226
    %v307 = vunpack.c.l.b16 %v227
    %v308 = vunpack.c.h.b16 %v227
    %v309 = vunpack.c.l.b16 %v228
    %v310 = vunpack.c.h.b16 %v228
    %v311 = vunpack.c.l.b16 %v229
    %v312 = vunpack.c.h.b16 %v229
    %v313 = vunpack.c.l.b16 %v230
    %v314 = vunpack.c.h.b16 %v230
    %v315 = vunpack.c.l.b16 %v231
    %v316 = vunpack.c.h.b16 %v231
    %v317 = vunpack.c.l.b16 %v232
    %v318 = vunpack.c.h.b16 %v232
    %v319 = vunpack.c.l.b16 %v233
    %v320 = vunpack.c.h.b16 %v233
    %v321 = vunpack.c.l.b16 %v234
    %v322 = vunpack.c.h.b16 %v234
    %v323 = vunpack.c.l.b16 %v235
    %v324 = vunpack.c.h.b16 %v235
    %v325 = vunpack.c.l.b16 %v236
    %v326 = vunpack.c.h.b16 %v236
    %v327 = vunpack.c.l.b16 %v237
    %v328 = vunpack.c.h.b16 %v237
    %v329 = vunpack.c.l.b16 %v238
    %v330 = vunpack.c.h.b16 %v238
    %v331 = vunpack.c.l.b16 %v239
    %v332 = vunpack.c.h.b16 %v239
    %v333 = vunpack.c.l.b16 %v240
    %v334 = vunpack.c.h.b16 %v240
    %v335 = vunpack.c.l.b16 %v241
    %v336 = vunpack.c.h.b16 %v241
    %v337 = vunpack.c.l.b16 %v242
    %v338 = vunpack.c.h.b16 %v242
    %v339 = vunpack.c.l.b16 %v243
    %v340 = vunpack.c.h.b16 %v243
    %v341 = vunpack.c.l.b16 %v244
    %v342 = vunpack.c.h.b16 %v244
    %v343 = vunpack.c.l.b16 %v245
    %v344 = vunpack.c.h.b16 %v245
    %v345 = vunpack.c.l.b16 %v246
    %v346 = vunpack.c.h.b16 %v246
    %v347 = vunpack.c.l.b16 %v247
    %v348 = vunpack.c.h.b16 %v247
    %v349 = vunpack.c.l.b16 %v248
    %v350 = vunpack.c.h.b16 %v248
    %v351 = vunpack.c.l.b16 %v249
    %v352 = vunpack.c.h.b16 %v249
    %v353 = vunpack.c.l.b16 %v250
    %v354 = vunpack.c.h.b16 %v250
    %v355 = vunpack.c.l.b16 %v251
    %v356 = vunpack.c.h.b16 %v251
    %v357 = vunpack.c.l.b16 %v252
    %v358 = vunpack.c.h.b16 %v252
    %v359 = vunpack.c.l.b16 %v253
    %v360 = vunpack.c.h.b16 %v253
    %v361 = vunpack.c.l.b16 %v254
    %v362 = vunpack.c.h.b16 %v254
    %v363 = vpack.c.b16 %v301, %v299
    %v364 = vpack.c.b16 %v302, %v300
    %v365 = vpack.c.b16 %v305, %v303
    %v366 = vpack.c.b16 %v306, %v304
    %v367 = vpack.c.b16 %v309, %v307
    %v368 = vpack.c.b16 %v310, %v308
    %v369 = vpack.c.b16 %v313, %v311
    %v370 = vpack.c.b16 %v314, %v312
    %v371 = vpack.c.b16 %v317, %v315
    %v372 = vpack.c.b16 %v318, %v316
    %v373 = vpack.c.b16 %v321, %v319
    %v374 = vpack.c.b16 %v322, %v320
    %v375 = vpack.c.b16 %v325, %v323
    %v376 = vpack.c.b16 %v326, %v324
    %v377 = vpack.c.b16 %v329, %v327
    %v378 = vpack.c.b16 %v330, %v328
    %v379 = vpack.c.b16 %v333, %v331
    %v380 = vpack.c.b16 %v334, %v332
    %v381 = vpack.c.b16 %v337, %v335
    %v382 = vpack.c.b16 %v338, %v336
    %v383 = vpack.c.b16 %v341, %v339
    %v384 = vpack.c.b16 %v342, %v340
    %v385 = vpack.c.b16 %v345, %v343
    %v386 = vpack.c.b16 %v346, %v344
    %v387 = vpack.c.b16 %v349, %v347
    %v388 = vpack.c.b16 %v350, %v348
    %v389 = vpack.c.b16 %v353, %v351
    %v390 = vpack.c.b16 %v354, %v352
    %v391 = vpack.c.b16 %v357, %v355
    %v392 = vpack.c.b16 %v358, %v356
    %v393 = vpack.c.b16 %v361, %v359
    %v394 = vpack.c.b16 %v362, %v360
    %427 = vmatprep.subr.bf16.mxu0 %v364
    %428 = vmatpush1.bf16.msra.mxu0 %v363
    %429 = vmatprep.subr.bf16.mxu0 %v366
    %430 = vmatpush1.bf16.msra.mxu0 %v365
    %431 = vmatprep.subr.bf16.mxu0 %v368
    %432 = vmatpush1.bf16.msra.mxu0 %v367
    %433 = vmatprep.subr.bf16.mxu0 %v370
    %434 = vmatpush1.bf16.msra.mxu0 %v369
    %435 = vmatprep.subr.bf16.mxu0 %v372
    %436 = vmatpush1.bf16.msra.mxu0 %v371
    %437 = vmatprep.subr.bf16.mxu0 %v374
    %438 = vmatpush1.bf16.msra.mxu0 %v373
    %439 = vmatprep.subr.bf16.mxu0 %v376
    %440 = vmatpush1.bf16.msra.mxu0 %v375
    %441 = vmatprep.subr.bf16.mxu0 %v378
    %442 = vmatpush1.bf16.msra.mxu0 %v377
    %443 = vmatprep.subr.bf16.mxu0 %v380
    %444 = vmatpush1.bf16.msra.mxu0 %v379
    %445 = vmatprep.subr.bf16.mxu0 %v382
    %446 = vmatpush1.bf16.msra.mxu0 %v381
    %447 = vmatprep.subr.bf16.mxu0 %v384
    %448 = vmatpush1.bf16.msra.mxu0 %v383
    %449 = vmatprep.subr.bf16.mxu0 %v386
    %450 = vmatpush1.bf16.msra.mxu0 %v385
    %451 = vmatprep.subr.bf16.mxu0 %v388
    %452 = vmatpush1.bf16.msra.mxu0 %v387
    %453 = vmatprep.subr.bf16.mxu0 %v390
    %454 = vmatpush1.bf16.msra.mxu0 %v389
    %455 = vmatprep.subr.bf16.mxu0 %v392
    %456 = vmatpush1.bf16.msra.mxu0 %v391
    %457 = vmatprep.subr.bf16.mxu0 %v394
    %458 = vmatpush1.bf16.msra.mxu0 %v393
    %459 = vmatprep.mubr.bf16.mxu0 %v222
    %460 = vmatmul.mubr.bf16.gmra.mrb[0].mxu0 %v221
    %v461 = vpop.f32.mrb[0].mxu0
    %v462 = vadd.f32 %v260, %v461
    %v463 = vpop.f32.mrb[0].mxu0
    %v464 = vadd.f32 %v264, %v463
    %v465 = vpop.f32.mrb[0].mxu0
    %v466 = vpop.f32.mrb[0].mxu0
    %467 = vdwg.mxu0
    %v468 = vmax.f32 %v462, 0.0
    %v469 = vmax.f32 %v464, 0.0
    %v470 = vpack.c.bf16 %v468, %v468
    %v471 = vpack.c.bf16 %v469, %v469
    %v472 = vld [vmem:[#allocation7] sm:$0xf]
    %v473 = vld [vmem:[#allocation7 + $0x4] sm:$0xf]
    %v474 = vld [vmem:[#allocation7 + $0x8] sm:$0xf]
    %v475 = vld [vmem:[#allocation7 + $0xc] sm:$0xf]
    %v476 = vld [vmem:[#allocation7 + $0x10] sm:$0xf]
    %v477 = vld [vmem:[#allocation7 + $0x14] sm:$0xf]
    %v478 = vld [vmem:[#allocation7 + $0x18] sm:$0xf]
    %v479 = vld [vmem:[#allocation7 + $0x1c] sm:$0xf]
    %v480 = vld [vmem:[#allocation7 + $0x20] sm:$0xf]
    %v481 = vld [vmem:[#allocation7 + $0x24] sm:$0xf]
    %v482 = vld [vmem:[#allocation7 + $0x28] sm:$0xf]
    %v483 = vld [vmem:[#allocation7 + $0x2c] sm:$0xf]
    %v484 = vld [vmem:[#allocation7 + $0x30] sm:$0xf]
    %v485 = vld [vmem:[#allocation7 + $0x34] sm:$0xf]
    %v486 = vld [vmem:[#allocation7 + $0x38] sm:$0xf]
    %v487 = vld [vmem:[#allocation7 + $0x3c] sm:$0xf]
    %v488 = vld [vmem:[#allocation7 + $0x40] sm:$0xf]
    %v489 = vld [vmem:[#allocation7 + $0x44] sm:$0xf]
    %v490 = vld [vmem:[#allocation7 + $0x48] sm:$0xf]
    %v491 = vld [vmem:[#allocation7 + $0x4c] sm:$0xf]
    %v492 = vld [vmem:[#allocation7 + $0x50] sm:$0xf]
    %v493 = vld [vmem:[#allocation7 + $0x54] sm:$0xf]
    %v494 = vld [vmem:[#allocation7 + $0x58] sm:$0xf]
    %v495 = vld [vmem:[#allocation7 + $0x5c] sm:$0xf]
    %v496 = vld [vmem:[#allocation7 + $0x60] sm:$0xf]
    %v497 = vld [vmem:[#allocation7 + $0x64] sm:$0xf]
    %v498 = vld [vmem:[#allocation7 + $0x68] sm:$0xf]
    %v499 = vld [vmem:[#allocation7 + $0x6c] sm:$0xf]
    %v500 = vld [vmem:[#allocation7 + $0x70] sm:$0xf]
    %v501 = vld [vmem:[#allocation7 + $0x74] sm:$0xf]
    %v502 = vld [vmem:[#allocation7 + $0x78] sm:$0xf]
    %v503 = vld [vmem:[#allocation7 + $0x7c] sm:$0xf]
    %v504 = vld [vmem:[%s6] sm:$0x1]
    %v506 = vlaneseq
    %v507 = vshrl.u32 %v506, 7
    %v508 = vsub.s32 0, %v507
    %v509 = vrot.slane %v504, %v508
    %v543 = vunpack.c.l.b16 %v472
    %v544 = vunpack.c.l.b16 %v473
    %v545 = vunpack.c.l.b16 %v474
    %v546 = vunpack.c.l.b16 %v475
    %v547 = vunpack.c.l.b16 %v476
    %v548 = vunpack.c.l.b16 %v477
    %v549 = vunpack.c.l.b16 %v478
    %v550 = vunpack.c.l.b16 %v479
    %v551 = vunpack.c.l.b16 %v480
    %v552 = vunpack.c.l.b16 %v481
    %v553 = vunpack.c.l.b16 %v482
    %v554 = vunpack.c.l.b16 %v483
    %v555 = vunpack.c.l.b16 %v484
    %v556 = vunpack.c.l.b16 %v485
    %v557 = vunpack.c.l.b16 %v486
    %v558 = vunpack.c.l.b16 %v487
    %v559 = vunpack.c.l.b16 %v488
    %v560 = vunpack.c.l.b16 %v489
    %v561 = vunpack.c.l.b16 %v490
    %v562 = vunpack.c.l.b16 %v491
    %v563 = vunpack.c.l.b16 %v492
    %v564 = vunpack.c.l.b16 %v493
    %v565 = vunpack.c.l.b16 %v494
    %v566 = vunpack.c.l.b16 %v495
    %v567 = vunpack.c.l.b16 %v496
    %v568 = vunpack.c.l.b16 %v497
    %v569 = vunpack.c.l.b16 %v498
    %v570 = vunpack.c.l.b16 %v499
    %v571 = vunpack.c.l.b16 %v500
    %v572 = vunpack.c.l.b16 %v501
    %v573 = vunpack.c.l.b16 %v502
    %v574 = vunpack.c.l.b16 %v503
    %v575 = vpack.c.b16 %v544, %v543
    %v576 = vpack.c.b16 %v546, %v545
    %v577 = vpack.c.b16 %v548, %v547
    %v578 = vpack.c.b16 %v550, %v549
    %v579 = vpack.c.b16 %v552, %v551
    %v580 = vpack.c.b16 %v554, %v553
    %v581 = vpack.c.b16 %v556, %v555
    %v582 = vpack.c.b16 %v558, %v557
    %v583 = vpack.c.b16 %v560, %v559
    %v584 = vpack.c.b16 %v562, %v561
    %v585 = vpack.c.b16 %v564, %v563
    %v586 = vpack.c.b16 %v566, %v565
    %v587 = vpack.c.b16 %v568, %v567
    %v588 = vpack.c.b16 %v570, %v569
    %v589 = vpack.c.b16 %v572, %v571
    %v590 = vpack.c.b16 %v574, %v573
    %607 = vmatprep.subr.bf16.mxu0 0
    %608 = vmatpush1.bf16.msra.mxu0 %v575
    %609 = vmatprep.subr.bf16.mxu0 0
    %610 = vmatpush1.bf16.msra.mxu0 %v576
    %611 = vmatprep.subr.bf16.mxu0 0
    %612 = vmatpush1.bf16.msra.mxu0 %v577
    %613 = vmatprep.subr.bf16.mxu0 0
    %614 = vmatpush1.bf16.msra.mxu0 %v578
    %615 = vmatprep.subr.bf16.mxu0 0
    %616 = vmatpush1.bf16.msra.mxu0 %v579
    %617 = vmatprep.subr.bf16.mxu0 0
    %618 = vmatpush1.bf16.msra.mxu0 %v580
    %619 = vmatprep.subr.bf16.mxu0 0
    %620 = vmatpush1.bf16.msra.mxu0 %v581
    %621 = vmatprep.subr.bf16.mxu0 0
    %622 = vmatpush1.bf16.msra.mxu0 %v582
    %623 = vmatprep.subr.bf16.mxu0 0
    %624 = vmatpush1.bf16.msra.mxu0 %v583
    %625 = vmatprep.subr.bf16.mxu0 0
    %626 = vmatpush1.bf16.msra.mxu0 %v584
    %627 = vmatprep.subr.bf16.mxu0 0
    %628 = vmatpush1.bf16.msra.mxu0 %v585
    %629 = vmatprep.subr.bf16.mxu0 0
    %630 = vmatpush1.bf16.msra.mxu0 %v586
    %631 = vmatprep.subr.bf16.mxu0 0
    %632 = vmatpush1.bf16.msra.mxu0 %v587
    %633 = vmatprep.subr.bf16.mxu0 0
    %634 = vmatpush1.bf16.msra.mxu0 %v588
    %635 = vmatprep.subr.bf16.mxu0 0
    %636 = vmatpush1.bf16.msra.mxu0 %v589
    %637 = vmatprep.subr.bf16.mxu0 0
    %638 = vmatpush1.bf16.msra.mxu0 %v590
    %639 = vmatprep.mubr.bf16.mxu0 %v471
    %640 = vmatmul.mubr.bf16.gmra.mrb[0].mxu0 %v470
    %v641 = vpop.f32.mrb[0].mxu0
    %v642 = vadd.f32 %v509, %v641
    %v643 = vpop.f32.mrb[0].mxu0
    %v644 = vpop.f32.mrb[0].mxu0
    %v645 = vpop.f32.mrb[0].mxu0
    %646 = vdwg.mxu0
    %v647 = vtanh.pop %v642
    %648 = vst [vmem:[#allocation8] sm:$0xff] %v647
    // Predicated region
    $region42: #{actor_forward.1} parent=1 // pred_check
      _
    $region43: #{actor_forward.1} parent=1 // pred_check_branch
      %650 = sbr.rel (0) target = $region45
    $region44: #{actor_forward.1} parent=1 // pred_region
      %s652 = ssub.s32 128, 128
      %653 = vsyncadd [#allocation4], %s652
      %s655 = sshll.u32 [#allocation8], 4
      %s656 = int_to_ptr.vmem [resolvable:$true] %s655
      %658 = dma.vmem_to_hbm [thread:$0]  %s656, 128, %s7, [#allocation4]
    $region45: #{actor_forward.1} parent=1 // pred_fallthru
      _
    // Predicated region
    $region46: #{actor_forward.1} parent=1 // pred_check
      _
    $region47: #{actor_forward.1} parent=1 // pred_check_branch
      %660 = sbr.rel (0) target = $region49
    $region48: #{actor_forward.1} parent=1 // pred_region
      %661 = dma.done [#allocation4], 128
    $region49: #{actor_forward.1} parent=1 // pred_fallthru
      _
    %662 = vsyncpa [#allocation3], 1
    %663 = vsyncpa [#allocation6], 1
    %664 = vsyncpa [#allocation4], 1

</llo_original>
